<compile_context>
chip_gen: v6e
topology: v6e:2x2x1
jax: 0.10.0
libtpu: 0.0.40
codegen_flags: <defaults>
</compile_context>

<pallas_src>
import functools

import jax
import jax.numpy as jnp
import numpy as np
from jax.experimental import pallas as pl
from jax.experimental.pallas import tpu as pltpu


def _round_up(a: int, m: int) -> int:
    return ((a + m - 1) // m) * m


def _device_defaults():
    """(default lane tile, VMEM-limit cap in bytes) per TPU generation."""
    try:
        kind = jax.devices()[0].device_kind.lower()
    except Exception:  # pragma: no cover - CPU fallback / unknown device
        kind = ""
    if "v5 lite" in kind or "v5e" in kind or "v5litepod" in kind:
        # 16 MiB default scoped VMEM, no bf16 VPU -> keep tiles modest.
        return 512, 100 << 20
    if "v6" in kind or "trillium" in kind:
        # 128 MiB physical VMEM, bf16 VPU/MXU -> big tiles are fine.
        return 1024, 100 << 20
    # v7x (64 MiB physical VMEM, 2 TensorCores) and unknown chips: conservative.
    return 1024, 48 << 20


# ----------------------------- Pallas kernel -------------------------------
def _cyclenet_kernel(x_ref, corr_ref, w_ref, wres_ref, o_ref, *,
                     seq_len: int, use_revin: bool):
    """One lane tile: x (S, TN), corr (P, TN), w (P, S), wres (P, 1) -> out (P, TN)."""
    x = x_ref[...].astype(jnp.float32)                          # (S, TN)
    w = w_ref[...]                                              # (P, S)

    # MXU, lane-dense: y[p, n] = sum_s W[p, s] * x_raw[s, n], f32 accumulation.
    # (cast of x to the operand dtype happens only here; all elementwise math
    #  below stays in f32 — matters on v5e which has no bf16 VPU.)
    y = jnp.dot(w, x.astype(w.dtype), preferred_element_type=jnp.float32)

    corr = corr_ref[...].astype(jnp.float32)                    # (P, TN)

    if use_revin:
        # RevIN folded algebraically (inv_std * std cancels exactly):
        #   y = W @ x_raw + corr * std + mean * (1 - rowsum(W))
        # Per-lane stats in one pass over the raw tile; unbiased variance
        # (torch.var default) + 1e-5 epsilon.  Zero-padded lanes give
        # mean=0, var=1e-5, corr=0 -> finite zeros, sliced off by the wrapper.
        s1 = jnp.sum(x, axis=0, keepdims=True)                  # (1, TN)
        s2 = jnp.sum(x * x, axis=0, keepdims=True)              # (1, TN)
        mean = s1 * (1.0 / seq_len)
        var = (s2 - s1 * mean) * (1.0 / (seq_len - 1)) + 1e-5
        std = jnp.sqrt(var)
        y = y + corr * std + mean * wres_ref[...].astype(jnp.float32)
    else:
        y = y + corr

    o_ref[...] = y.astype(o_ref.dtype)


# ------------------------------ wrapper -------------------------------------
def cyclenet_forward(x, cycle_index, cycle_data, w, b, *,
                     cycle_len: int, pred_len: int, use_revin: bool = True,
                     lane_tile: int | None = None, bf16_matmul: bool = False,
                     stream_bf16: bool = False):
    """CycleNet forward (linear model).

    x:           (B, seq_len, enc_in) float32
    cycle_index: (B,) int32
    cycle_data:  (cycle_len, enc_in) float32   -- RecurrentCycle.data
    w:           (pred_len, seq_len) float32   -- nn.Linear weight
    b:           (pred_len,)         float32   -- nn.Linear bias
    returns:     (B, pred_len, enc_in) float32
    """
    B, S, C = x.shape
    P, L, N = pred_len, cycle_len, B * C

    if use_revin and S < 2:
        raise ValueError("use_revin=True requires seq_len >= 2 (unbiased variance).")

    default_tile, vmem_cap = _device_defaults()
    if lane_tile is None:
        lane_tile = default_tile

    # --- fold RecurrentCycle (both windows) + Linear bias into one correction,
    #     produced directly in P-major layout (no (B,P,C)->(P,B*C) transpose):
    #       corr[p, b, c] = Q((cycle_index[b]+S+p)%L, c) + bias[p]
    #                       - sum_s W[p,s] * Q((cycle_index[b]+s)%L, c)
    # TODO(synk): when w/b/cycle_data are static across many calls and B >= L,
    # the (P, L, C) table below could be cached outside this function.
    ar_s = jnp.arange(S, dtype=jnp.int32)
    ar_p = jnp.arange(P, dtype=jnp.int32)
    if B < L:
        # per-batch correction: avoids building the full (P, L, C) table.
        idx_in = (cycle_index[:, None] + ar_s[None, :]) % L               # (B, S)
        idx_out = (cycle_index[None, :] + S + ar_p[:, None]) % L          # (P, B)
        q_in = cycle_data[idx_in]                                         # (B, S, C)
        q_out = cycle_data[idx_out]                                       # (P, B, C)
        corr_t = (q_out + b[:, None, None]
                  - jnp.einsum("ps,bsc->pbc", w, q_in)).reshape(P, N)     # (P, B*C)
    else:
        ar_l = jnp.arange(L, dtype=jnp.int32)
        idx_in_all = (ar_l[:, None] + ar_s[None, :]) % L                  # (L, S)
        idx_out_all = (ar_l[None, :] + S + ar_p[:, None]) % L             # (P, L)
        q_in_all = cycle_data[idx_in_all]                                 # (L, S, C)
        q_out_all = cycle_data[idx_out_all]                               # (P, L, C)
        corr_all = (q_out_all + b[:, None, None]
                    - jnp.einsum("ps,lsc->plc", w, q_in_all))             # (P, L, C)
        corr_t = corr_all[:, cycle_index, :].reshape(P, N)                # (P, B*C)

    # --- lane-dense relayout: (B, S, C) -> (S, B*C) ---
    x_t = jnp.transpose(x, (1, 0, 2)).reshape(S, N)

    stream_dtype = jnp.bfloat16 if stream_bf16 else jnp.float32
    x_t = x_t.astype(stream_dtype)
    corr_t = corr_t.astype(stream_dtype)

    # Lane tile: multiple of 128; prefer >= 2 grid steps (v7x megacore) when the
    # problem is wide enough.
    n128 = _round_up(N, 128)
    tn = _round_up(min(lane_tile, n128), 128)
    if n128 // tn < 2 and n128 >= 256:
        tn = _round_up(pl.cdiv(n128, 2), 128)
    n_pad = _round_up(N, tn)
    if n_pad != N:
        # Zero padding is required for correctness here: padded lanes yield
        # mean=0 / var=eps / corr=0 -> finite outputs, sliced off below.
        x_t = jnp.pad(x_t, ((0, 0), (0, n_pad - N)))
        corr_t = jnp.pad(corr_t, ((0, 0), (0, n_pad - N)))

    w_in = w.astype(jnp.bfloat16 if bf16_matmul else jnp.float32)
    # RevIN fold needs rowsum(W); pass (1 - rowsum) precomputed, shape (P, 1).
    wres = (1.0 - jnp.sum(w, axis=1, keepdims=True)).astype(jnp.float32)

    # Raise the scoped-VMEM limit only when the double-buffered working set
    # actually needs it (small problems keep the compiler defaults).
    it_stream = jnp.dtype(stream_dtype).itemsize
    it_out = jnp.dtype(x.dtype).itemsize
    it_w = jnp.dtype(w_in.dtype).itemsize
    work = (2 * tn * (S * it_stream + P * it_stream + P * it_out)   # pipelined bufs
            + (P * S + P) * it_w                                    # resident params
            + 2 * S * tn * 4)                                       # in-kernel temps
    vmem_limit = None
    if work > (16 << 20):
        vmem_limit = min(max(int(work * 1.5), 32 << 20), vmem_cap)

    cost = pl.CostEstimate(
        flops=2 * P * S * n_pad + (8 * S + 4 * P) * n_pad,
        transcendentals=n_pad if use_revin else 0,
        bytes_accessed=(S + P) * n_pad * it_stream + P * n_pad * it_out
                       + (P * S + P) * it_w + P * 4,
    )

    grid = (n_pad // tn,)
    kernel = functools.partial(_cyclenet_kernel, seq_len=S, use_revin=use_revin)

    out_t = pl.pallas_call(
        kernel,
        out_shape=jax.ShapeDtypeStruct((P, n_pad), x.dtype),
        grid=grid,
        in_specs=[
            pl.BlockSpec((S, tn), lambda i: (0, i)),   # x, lane tile
            pl.BlockSpec((P, tn), lambda i: (0, i)),   # folded cycle+bias correction
            pl.BlockSpec((P, S), lambda i: (0, 0)),    # weight, resident in VMEM
            pl.BlockSpec((P, 1), lambda i: (0, 0)),    # 1 - rowsum(W)
        ],
        out_specs=pl.BlockSpec((P, tn), lambda i: (0, i)),
        compiler_params=pltpu.CompilerParams(
            dimension_semantics=("parallel",),
            # let XLA fuse the x / corr relayout+pad producers into the call's
            # operands instead of materializing them in HBM.
            allow_input_fusion=[True, True, False, False],
            vmem_limit_bytes=vmem_limit),
        cost_estimate=cost,
    )(x_t, corr_t, w_in, wres)

    out = jnp.transpose(out_t[:, :N].reshape(P, B, C), (1, 0, 2))        # (B, P, C)
    return out


# ------------------------- pure-JAX reference --------------------------------
def cyclenet_reference(x, cycle_index, cycle_data, w, b,
                       *, cycle_len, pred_len, use_revin=True):
    B, S, C = x.shape
    if use_revin:
        seq_mean = jnp.mean(x, axis=1, keepdims=True)
        seq_var = jnp.var(x, axis=1, keepdims=True, ddof=1) + 1e-5
        x = (x - seq_mean) / jnp.sqrt(seq_var)
    idx_in = (cycle_index[:, None] + jnp.arange(S)[None, :]) % cycle_len
    x = x - cycle_data[idx_in]
    y = jnp.einsum("bsc,ps->bpc", x, w) + b[None, :, None]
    idx_out = (((cycle_index + S) % cycle_len)[:, None]
               + jnp.arange(pred_len)[None, :]) % cycle_len
    y = y + cycle_data[idx_out]
    if use_revin:
        y = y * jnp.sqrt(seq_var) + seq_mean
    return y


# --------------------------------- main --------------------------------------
if __name__ == "__main__":
    # small config consistent with the module
    B, SEQ_LEN, PRED_LEN, ENC_IN, CYCLE_LEN = 2, 16, 8, 4, 12

    key = jax.random.PRNGKey(0)
    k_x, k_idx, k_cyc, k_w, k_b = jax.random.split(key, 5)

    x = jax.random.normal(k_x, (B, SEQ_LEN, ENC_IN), dtype=jnp.float32)
    cycle_index = jax.random.randint(k_idx, (B,), 0, CYCLE_LEN, dtype=jnp.int32)

    # deterministic parameter init (shapes from __init__):
    #   RecurrentCycle.data : (cycle_len, enc_in)
    #   nn.Linear(seq_len, pred_len): weight (pred_len, seq_len), bias (pred_len,)
    cycle_data = 0.1 * jax.random.normal(k_cyc, (CYCLE_LEN, ENC_IN), dtype=jnp.float32)
    bound = 1.0 / np.sqrt(SEQ_LEN)
    w = jax.random.uniform(k_w, (PRED_LEN, SEQ_LEN), minval=-bound, maxval=bound,
                           dtype=jnp.float32)
    b = jax.random.uniform(k_b, (PRED_LEN,), minval=-bound, maxval=bound,
                           dtype=jnp.float32)

    # TODO(synk): only the 'linear' model_type is implemented; the 'mlp' variant
    # would add a second fused matmul + ReLU in the same kernel.

    # 1) f32 path, use_revin=True, per-batch corr path (B < cycle_len).
    ref = cyclenet_reference(x, cycle_index, cycle_data, w, b,
                             cycle_len=CYCLE_LEN, pred_len=PRED_LEN, use_revin=True)
    out = cyclenet_forward(x, cycle_index, cycle_data, w, b,
                           cycle_len=CYCLE_LEN, pred_len=PRED_LEN,
                           use_revin=True, bf16_matmul=False)
    out = jax.block_until_ready(out)
    assert out.shape == (B, PRED_LEN, ENC_IN)
    np.testing.assert_allclose(np.asarray(out), np.asarray(ref), rtol=1e-4, atol=1e-4)

    # 2) bf16 MXU operands (f32 accumulation), looser tolerance.
    out_bf16 = cyclenet_forward(x, cycle_index, cycle_data, w, b,
                                cycle_len=CYCLE_LEN, pred_len=PRED_LEN,
                                use_revin=True, bf16_matmul=True)
    out_bf16 = jax.block_until_ready(out_bf16)
    np.testing.assert_allclose(np.asarray(out_bf16), np.asarray(ref),
                               rtol=3e-2, atol=3e-2)

    # 3) use_revin=False path.
    ref_nr = cyclenet_reference(x, cycle_index, cycle_data, w, b,
                                cycle_len=CYCLE_LEN, pred_len=PRED_LEN, use_revin=False)
    out_nr = cyclenet_forward(x, cycle_index, cycle_data, w, b,
                              cycle_len=CYCLE_LEN, pred_len=PRED_LEN, use_revin=False)
    out_nr = jax.block_until_ready(out_nr)
    np.testing.assert_allclose(np.asarray(out_nr), np.asarray(ref_nr),
                               rtol=1e-4, atol=1e-4)

    # 4) table corr path (B >= cycle_len): small cycle.
    L2 = 2
    cycle_data2 = 0.1 * jax.random.normal(k_cyc, (L2, ENC_IN), dtype=jnp.float32)
    cycle_index2 = cycle_index % L2
    ref2 = cyclenet_reference(x, cycle_index2, cycle_data2, w, b,
                              cycle_len=L2, pred_len=PRED_LEN, use_revin=True)
    out2 = cyclenet_forward(x, cycle_index2, cycle_data2, w, b,
                            cycle_len=L2, pred_len=PRED_LEN, use_revin=True)
    out2 = jax.block_until_ready(out2)
    np.testing.assert_allclose(np.asarray(out2), np.asarray(ref2),
                               rtol=1e-4, atol=1e-4)

    print("KERNEL_OK")
</pallas_src>

<mosaic_0001>
module attributes {stable_mosaic.version = 11 : i64} {
  func.func @_cyclenet_kernel(%arg0: i32, %arg1: memref<16x128xf32, #tpu.memory_space<vmem>>, %arg2: memref<8x128xf32, #tpu.memory_space<vmem>>, %arg3: memref<8x16xf32, #tpu.memory_space<vmem>>, %arg4: memref<8x1xf32, #tpu.memory_space<vmem>>, %arg5: memref<8x128xf32, #tpu.memory_space<vmem>>) attributes {dimension_semantics = [#tpu.dimension_semantics<parallel>], iteration_bounds = array<i64: 1>, scalar_prefetch = 0 : i64, scratch_operands = 0 : i64, tpu.core_type = #tpu.core_type<tc>, window_params = [{transform_indices = @transform_0, window_bounds = array<i64: 16, 128>}, {transform_indices = @transform_1, window_bounds = array<i64: 8, 128>}, {pipeline_mode = #tpu.pipeline_mode<synchronous>, transform_indices = @transform_2, window_bounds = array<i64: 8, 16>}, {pipeline_mode = #tpu.pipeline_mode<synchronous>, transform_indices = @transform_3, window_bounds = array<i64: 8, 1>}, {transform_indices = @transform_4, window_bounds = array<i64: 8, 128>}]} {
    %c0 = arith.constant 0 : index
    %c0_0 = arith.constant 0 : index
    %0 = vector.load %arg1[%c0, %c0_0] : memref<16x128xf32, #tpu.memory_space<vmem>>, vector<16x128xf32>
    %c0_1 = arith.constant 0 : index
    %c0_2 = arith.constant 0 : index
    %1 = vector.load %arg3[%c0_1, %c0_2] : memref<8x16xf32, #tpu.memory_space<vmem>>, vector<8x16xf32>
    %cst = arith.constant dense<0.000000e+00> : vector<8x128xf32>
    %2 = tpu.matmul %1, %0, %cst {dimension_numbers = #tpu.dot_dimension_numbers<[1], [0], [0], [1], [0, 0, 1, 1], [], []>} : vector<8x16xf32>, vector<16x128xf32>, vector<8x128xf32> -> vector<8x128xf32>
    %c0_3 = arith.constant 0 : index
    %c0_4 = arith.constant 0 : index
    %3 = vector.load %arg2[%c0_3, %c0_4] : memref<8x128xf32, #tpu.memory_space<vmem>>, vector<8x128xf32>
    %cst_5 = arith.constant dense<0.000000e+00> : vector<128xf32>
    %4 = vector.multi_reduction <add>, %0, %cst_5 [0] : vector<16x128xf32> to vector<128xf32>
    %5 = vector.shape_cast %4 : vector<128xf32> to vector<1x128xf32>
    %6 = arith.mulf %0, %0 : vector<16x128xf32>
    %cst_6 = arith.constant dense<0.000000e+00> : vector<128xf32>
    %7 = vector.multi_reduction <add>, %6, %cst_6 [0] : vector<16x128xf32> to vector<128xf32>
    %8 = vector.shape_cast %7 : vector<128xf32> to vector<1x128xf32>
    %cst_7 = arith.constant 6.250000e-02 : f32
    %9 = vector.broadcast %cst_7 : f32 to vector<1x128xf32>
    %10 = arith.mulf %5, %9 : vector<1x128xf32>
    %11 = arith.mulf %5, %10 : vector<1x128xf32>
    %12 = arith.subf %8, %11 : vector<1x128xf32>
    %cst_8 = arith.constant 0.0666666701 : f32
    %13 = vector.broadcast %cst_8 : f32 to vector<1x128xf32>
    %14 = arith.mulf %12, %13 : vector<1x128xf32>
    %cst_9 = arith.constant 9.99999974E-6 : f32
    %15 = vector.broadcast %cst_9 : f32 to vector<1x128xf32>
    %16 = arith.addf %14, %15 : vector<1x128xf32>
    %17 = math.sqrt %16 : vector<1x128xf32>
    %18 = vector.broadcast %17 : vector<1x128xf32> to vector<8x128xf32>
    %19 = arith.mulf %3, %18 : vector<8x128xf32>
    %20 = arith.addf %2, %19 : vector<8x128xf32>
    %c0_10 = arith.constant 0 : index
    %c0_11 = arith.constant 0 : index
    %21 = vector.load %arg4[%c0_10, %c0_11] : memref<8x1xf32, #tpu.memory_space<vmem>>, vector<8x1xf32>
    %22 = vector.broadcast %10 : vector<1x128xf32> to vector<8x128xf32>
    %23 = vector.broadcast %21 : vector<8x1xf32> to vector<8x128xf32>
    %24 = arith.mulf %22, %23 : vector<8x128xf32>
    %25 = arith.addf %20, %24 : vector<8x128xf32>
    %c0_12 = arith.constant 0 : index
    %c0_13 = arith.constant 0 : index
    %26 = vector.load %arg5[%c0_12, %c0_13] : memref<8x128xf32, #tpu.memory_space<vmem>>, vector<8x128xf32>
    tpu.vector_store %arg5[%c0_12, %c0_13], %25 {strides = array<i32>} : memref<8x128xf32, #tpu.memory_space<vmem>>, vector<8x128xf32>,
    return
  }
  func.func @transform_0(%arg0: i32) -> (i32, i32) {
    %c0_i32 = arith.constant 0 : i32
    %c0_i32_0 = arith.constant 0 : i32
    return %c0_i32, %arg0 : i32, i32
  }
  func.func @transform_1(%arg0: i32) -> (i32, i32) {
    %c0_i32 = arith.constant 0 : i32
    %c0_i32_0 = arith.constant 0 : i32
    return %c0_i32, %arg0 : i32, i32
  }
  func.func @transform_2(%arg0: i32) -> (i32, i32) {
    %c0_i32 = arith.constant 0 : i32
    %c0_i32_0 = arith.constant 0 : i32
    %c0_i32_1 = arith.constant 0 : i32
    return %c0_i32, %c0_i32_0 : i32, i32
  }
  func.func @transform_3(%arg0: i32) -> (i32, i32) {
    %c0_i32 = arith.constant 0 : i32
    %c0_i32_0 = arith.constant 0 : i32
    %c0_i32_1 = arith.constant 0 : i32
    return %c0_i32, %c0_i32_0 : i32, i32
  }
  func.func @transform_4(%arg0: i32) -> (i32, i32) {
    %c0_i32 = arith.constant 0 : i32
    %c0_i32_0 = arith.constant 0 : i32
    return %c0_i32, %arg0 : i32, i32
  }
}

</mosaic_0001>

<llo_original>
// kernel: tpu_custom_call.1
$region0: #{tpu_custom_call.1}
  #allocation0 [shape = 'u32[]', space=smem, size = 0x4, offset = 0x4, fixed_abs, tag = 'smem constant byte address 0x4 - core index']
  #allocation1 [shape = 'u32[144,128]{1,0:T(1,128)}', space=vmem, size = 0x12000, scoped, tag = 'internal scratch']
  %s0 = inlined_call_operand.hbm [shape: f32[16,128], index: 0, kind: input, shape index: {}]
  %s1 = inlined_call_operand.vmem [shape: f32[8,128], index: 1, kind: input, shape index: {}]
  %s2 = inlined_call_operand.hbm [shape: f32[8,16], index: 2, kind: input, shape index: {}]
  %s3 = inlined_call_operand.vmem [shape: f32[8,1], index: 3, kind: input, shape index: {}]
  %s4 = inlined_call_operand.hbm [shape: f32[8,128], index: 4, kind: output, shape index: {}]
  %s5 = sld [smem:[#allocation0]]
  $region34: #{tpu_custom_call.1} parent=0
    _
  %s7 = ssub.s32 1, %s5
  %s8 = scalar_select 0, %s7, %s5
  $region1: #{tpu_custom_call.1} parent=0
    #allocation2 [shape = 'u8[8192]{0}', space=vmem, size = 0x2000, scoped, tag = 'input window, operand 0, single buffered']
    #allocation3 [shape = 's32[1]{0}', space=sflag, size = 0x4, scoped, tag = 'scoped memory for tpu_custom_call.1']
    #allocation4 [shape = 's32[1]{0}', space=sflag, size = 0x4, scoped, tag = 'scoped memory for tpu_custom_call.1']
    #allocation5 [shape = 'u8[4096]{0}', space=vmem, size = 0x1000, scoped, tag = 'input window, operand 2, single buffered']
    #allocation6 [shape = 's32[1]{0}', space=sflag, size = 0x4, scoped, tag = 'scoped memory for tpu_custom_call.1']
    #allocation7 [shape = 'u8[4096]{0}', space=vmem, size = 0x1000, scoped, tag = 'output window, operand 0, single buffered']
    %9 = vsyncpa [#allocation3], 0
    %10 = vsyncpa [#allocation6], 0
    %11 = vsyncpa [#allocation4], 0
    // Predicated region
    $region2: #{tpu_custom_call.1} parent=1 // pred_check
      _
    $region3: #{tpu_custom_call.1} parent=1 // pred_check_branch
      %13 = sbr.rel (0) target = $region5
    $region4: #{tpu_custom_call.1} parent=1 // pred_region
      %s15 = ssub.s32 256, 256
      %16 = vsyncadd [#allocation3], %s15
      %s17 = sshll.u32 [#allocation2], 4
      %s18 = int_to_ptr.vmem [resolvable:$true] %s17
      %23 = dma.hbm_to_vmem [thread:$0]  %s0, 256, %s18, [#allocation3], 128, 128, 8
    $region5: #{tpu_custom_call.1} parent=1 // pred_fallthru
      _
    // Predicated region
    $region6: #{tpu_custom_call.1} parent=1 // pred_check
      _
    $region7: #{tpu_custom_call.1} parent=1 // pred_check_branch
      %25 = sbr.rel (0) target = $region9
    $region8: #{tpu_custom_call.1} parent=1 // pred_region
      _
    $region9: #{tpu_custom_call.1} parent=1 // pred_fallthru
      _
    // Predicated region
    $region10: #{tpu_custom_call.1} parent=1 // pred_check
      _
    $region11: #{tpu_custom_call.1} parent=1 // pred_check_branch
      %27 = sbr.rel (0) target = $region13
    $region12: #{tpu_custom_call.1} parent=1 // pred_region
      %s29 = ssub.s32 128, 128
      %30 = vsyncadd [#allocation6], %s29
      %s32 = sshll.u32 [#allocation5], 4
      %s33 = int_to_ptr.vmem [resolvable:$true] %s32
      %35 = dma.hbm_to_vmem [thread:$0]  %s2, 128, %s33, [#allocation6]
    $region13: #{tpu_custom_call.1} parent=1 // pred_fallthru
      _
    // Predicated region
    $region14: #{tpu_custom_call.1} parent=1 // pred_check
      _
    $region15: #{tpu_custom_call.1} parent=1 // pred_check_branch
      %37 = sbr.rel (0) target = $region17
    $region16: #{tpu_custom_call.1} parent=1 // pred_region
      _
    $region17: #{tpu_custom_call.1} parent=1 // pred_fallthru
      _
    // Predicated region
    $region18: #{tpu_custom_call.1} parent=1 // pred_check
      _
    $region19: #{tpu_custom_call.1} parent=1 // pred_check_branch
      %39 = sbr.rel (0) target = $region21
    $region20: #{tpu_custom_call.1} parent=1 // pred_region
      %40 = dma.done [#allocation3], 256
    $region21: #{tpu_custom_call.1} parent=1 // pred_fallthru
      _
    // Predicated region
    $region22: #{tpu_custom_call.1} parent=1 // pred_check
      _
    $region23: #{tpu_custom_call.1} parent=1 // pred_check_branch
      %42 = sbr.rel (0) target = $region25
    $region24: #{tpu_custom_call.1} parent=1 // pred_region
      %43 = dma.done [#allocation6], 128
    $region25: #{tpu_custom_call.1} parent=1 // pred_fallthru
      _
    %v44 = vld [vmem:[#allocation2] sm:$0xff]
    %v45 = vld [vmem:[#allocation2 + $0x8] sm:$0xff]
    %v46 = vld [vmem:[#allocation5] sm:$0xff]
    %v47 = vld [vmem:[%s1] sm:$0xff]
    %v48 = vadd.f32 %v44, %v45
    %v49 = vrot.slane %v48, 4
    %v50 = vadd.f32 %v48, %v49
    %v51 = vrot.slane %v50, 2
    %v52 = vadd.f32 %v50, %v51
    %v53 = vrot.slane %v52, 1
    %v54 = vadd.f32 %v52, %v53
    %v55 = vmul.f32 %v44, %v44
    %v56 = vmul.f32 %v45, %v45
    %v57 = vadd.f32 %v55, %v56
    %v58 = vrot.slane %v57, 4
    %v59 = vadd.f32 %v57, %v58
    %v60 = vrot.slane %v59, 2
    %v61 = vadd.f32 %v59, %v60
    %v62 = vrot.slane %v61, 1
    %v63 = vadd.f32 %v61, %v62
    %v64 = vmul.f32 %v54, 0.0625
    %v65 = vmul.f32 %v54, %v64
    %v66 = vsub.f32 %v63, %v65
    %v67 = vmul.f32 %v66, 0.06666667
    %v68 = vadd.f32 %v67, 1e-05
    %v69 = vrsqrt.pop %v68
    %v70 = vmul.f32 %v68, %v69
    %vm71 = vcmp.eq.f32.partialorder %v68, inf
    %v72 = vsel %vm71, %v68, %v70
    %vm73 = vcmp.eq.f32.partialorder %v68, 0.0
    %v74 = vand.u32 %v68, 2147483648
    %v75 = vsel %vm73, %v74, %v72
    %v76 = vmul.f32 %v47, %v75
    %vm77 = vcmask 130048
    %v79 = vsel %vm77, %v46, 0
    %81 = vmatprep.subr.mxu0 0.0
    %82 = vmatpush1.msra.mxu0 0.0
    %83 = vmatprep.subr.mxu0 0.0
    %84 = vmatpush1.msra.mxu0 0.0
    %85 = vmatprep.subr.mxu0 0.0
    %86 = vmatpush1.msra.mxu0 0.0
    %87 = vmatprep.subr.mxu0 0.0
    %88 = vmatpush1.msra.mxu0 0.0
    %89 = vmatprep.subr.mxu0 0.0
    %90 = vmatpush1.msra.mxu0 0.0
    %91 = vmatprep.subr.mxu0 0.0
    %92 = vmatpush1.msra.mxu0 0.0
    %93 = vmatprep.subr.mxu0 0.0
    %94 = vmatpush1.msra.mxu0 0.0
    %95 = vmatprep.subr.mxu0 0.0
    %96 = vmatpush1.msra.mxu0 0.0
    %97 = vmatprep.subr.mxu0 0.0
    %98 = vmatpush1.msra.mxu0 0.0
    %99 = vmatprep.subr.mxu0 0.0
    %100 = vmatpush1.msra.mxu0 0.0
    %101 = vmatprep.subr.mxu0 0.0
    %102 = vmatpush1.msra.mxu0 0.0
    %103 = vmatprep.subr.mxu0 0.0
    %104 = vmatpush1.msra.mxu0 0.0
    %105 = vmatprep.subr.mxu0 0.0
    %106 = vmatpush1.msra.mxu0 0.0
    %107 = vmatprep.subr.mxu0 0.0
    %108 = vmatpush1.msra.mxu0 0.0
    %109 = vmatprep.subr.mxu0 0.0
    %110 = vmatpush1.msra.mxu0 %v45
    %111 = vmatprep.subr.mxu0 0.0
    %112 = vmatpush1.msra.mxu0 %v44
    %113 = vmatprep.subr.mxu0 0.0
    %114 = vmatpush2.msra.mxu0 0.0
    %115 = vmatprep.subr.mxu0 0.0
    %116 = vmatpush2.msra.mxu0 0.0
    %117 = vmatprep.subr.mxu0 0.0
    %118 = vmatpush2.msra.mxu0 0.0
    %119 = vmatprep.subr.mxu0 0.0
    %120 = vmatpush2.msra.mxu0 0.0
    %121 = vmatprep.subr.mxu0 0.0
    %122 = vmatpush2.msra.mxu0 0.0
    %123 = vmatprep.subr.mxu0 0.0
    %124 = vmatpush2.msra.mxu0 0.0
    %125 = vmatprep.subr.mxu0 0.0
    %126 = vmatpush2.msra.mxu0 0.0
    %127 = vmatprep.subr.mxu0 0.0
    %128 = vmatpush2.msra.mxu0 0.0
    %129 = vmatprep.subr.mxu0 0.0
    %130 = vmatpush2.msra.mxu0 0.0
    %131 = vmatprep.subr.mxu0 0.0
    %132 = vmatpush2.msra.mxu0 0.0
    %133 = vmatprep.subr.mxu0 0.0
    %134 = vmatpush2.msra.mxu0 0.0
    %135 = vmatprep.subr.mxu0 0.0
    %136 = vmatpush2.msra.mxu0 0.0
    %137 = vmatprep.subr.mxu0 0.0
    %138 = vmatpush2.msra.mxu0 0.0
    %139 = vmatprep.subr.mxu0 0.0
    %140 = vmatpush2.msra.mxu0 0.0
    %141 = vmatprep.subr.mxu0 0.0
    %142 = vmatpush2.msra.mxu0 0.0
    %143 = vmatprep.subr.mxu0 0.0
    %144 = vmatpush2.msra.mxu0 0.0
    %145 = vmatprep.mubr.f32.mxu0 0.0
    %146 = vmatmul.mubr.f32.gmra.mxu0 %v79
    %v147 = vpop.f32.mrf.mxu0
    %v148 = vadd.f32 %v76, %v147
    %v149 = vpop.f32.mrf.mxu0
    %150 = vdwg.mxu0
    %v151 = vld [vmem:[%s3] sm:$0xff]
    %153 = vset.pattern.permute.xlu0 0
    %154 = vperm.xlu0 %153, %v151
    %v155 = vpop.permute.xlu0 %154
    %v157 = vmul.f32 %v64, %v155
    %v158 = vadd.f32 %v148, %v157
    %159 = vst [vmem:[#allocation7] sm:$0xff] %v158
    // Predicated region
    $region26: #{tpu_custom_call.1} parent=1 // pred_check
      _
    $region27: #{tpu_custom_call.1} parent=1 // pred_check_branch
      %161 = sbr.rel (0) target = $region29
    $region28: #{tpu_custom_call.1} parent=1 // pred_region
      %s163 = ssub.s32 128, 128
      %164 = vsyncadd [#allocation4], %s163
      %s166 = sshll.u32 [#allocation7], 4
      %s167 = int_to_ptr.vmem [resolvable:$true] %s166
      %169 = dma.vmem_to_hbm [thread:$0]  %s167, 128, %s4, [#allocation4]
    $region29: #{tpu_custom_call.1} parent=1 // pred_fallthru
      _
    // Predicated region
    $region30: #{tpu_custom_call.1} parent=1 // pred_check
      _
    $region31: #{tpu_custom_call.1} parent=1 // pred_check_branch
      %171 = sbr.rel (0) target = $region33
    $region32: #{tpu_custom_call.1} parent=1 // pred_region
      %172 = dma.done [#allocation4], 128
    $region33: #{tpu_custom_call.1} parent=1 // pred_fallthru
      _
    %173 = vsyncpa [#allocation3], 1
    %174 = vsyncpa [#allocation6], 1
    %175 = vsyncpa [#allocation4], 1

</llo_original>
